<compile_context>
chip_gen: v5e
topology: v5e:2x2
jax: 0.10.0
libtpu: 0.0.40
codegen_flags: <defaults>
</compile_context>

<pallas_src>
import functools

import jax
import jax.numpy as jnp
from jax import lax
from jax.experimental import pallas as pl
from jax.experimental.pallas import tpu as pltpu


def _attention_kernel(x_ref, wq_ref, wk_ref, wv_ref,
                      gamma_ref, beta_ref,
                      w1_ref, b1_ref, w2_ref, b2_ref,
                      out_ref, *, if_res: bool):
    """One grid step = one block of batch elements (all of them by default).
    QKV and MLP matmuls run on the flattened (Bblk*S, D) slab; only the (S, S)
    attention is batched per batch element."""
    bblk, S, Din = x_ref.shape
    Dout = wq_ref.shape[1]

    # Leading-dim flatten is layout-free (last two dims untouched).
    x2 = x_ref[...].reshape(bblk * S, Din)            # native dtype, no upcast

    # QKV: native-dtype operands, f32 accumulation on the MXU.
    q = jnp.dot(x2, wq_ref[...], preferred_element_type=jnp.float32)
    k = jnp.dot(x2, wk_ref[...], preferred_element_type=jnp.float32)
    v = jnp.dot(x2, wv_ref[...], preferred_element_type=jnp.float32)
    q = q.reshape(bblk, S, Dout)
    k = k.reshape(bblk, S, Dout)
    v = v.reshape(bblk, S, Dout)

    scale = 1.0 / (float(Dout) ** 0.5)

    # scores = (q / sqrt(Dout)) @ k^T per batch; K-transpose folded into the
    # contraction (no explicit k.T materialization / XLU transpose).
    scores = jnp.einsum('bqd,bkd->bqk', q * scale, k,
                        preferred_element_type=jnp.float32)   # (Bblk, S, S) f32

    # softmax along last dim (f32 math); divide replaced by EUP reciprocal.
    m = jnp.max(scores, axis=-1, keepdims=True)
    e = jnp.exp(scores - m)
    denom = jnp.sum(e, axis=-1, keepdims=True)
    p = e * pl.reciprocal(denom, approx=True)

    # res = attn @ v  (dropout = identity in eval mode)
    res = jnp.einsum('bqk,bkd->bqd', p, v,
                     preferred_element_type=jnp.float32)      # (Bblk, S, Dout)
    res2 = res.reshape(bblk * S, Dout)                        # f32

    # LayerNorm(out_size), eps = 1e-5 (PyTorch default), f32 math.
    mean = jnp.mean(res2, axis=-1, keepdims=True)
    cent = res2 - mean
    var = jnp.mean(cent * cent, axis=-1, keepdims=True)
    ln = cent * lax.rsqrt(var + 1e-5)
    ln = ln * gamma_ref[...].astype(jnp.float32) + beta_ref[...].astype(jnp.float32)

    # Linear -> ReLU -> Linear (Dropout = identity); matmul operands kept in the
    # weights' native dtype, f32 accumulation.
    h = jnp.dot(ln.astype(w1_ref.dtype), w1_ref[...],
                preferred_element_type=jnp.float32) + b1_ref[...].astype(jnp.float32)
    h = jnp.maximum(h, 0.0)
    out = jnp.dot(h.astype(w2_ref.dtype), w2_ref[...],
                  preferred_element_type=jnp.float32) + b2_ref[...].astype(jnp.float32)

    if if_res:
        out = out + res2      # residual is the pre-LayerNorm attn @ v

    out_ref[...] = out.reshape(bblk, S, Dout).astype(out_ref.dtype)


@functools.partial(jax.jit, static_argnames=("if_res", "batch_blocks"))
def attention_forward(x_sbd, params, *, if_res=False, batch_blocks=1):
    """x_sbd: (seq, batch, in_size)  ->  (seq, batch, out_size).

    batch_blocks=1 collapses everything into a single grid step (best for
    v5e/v6e's single TensorCore); use batch_blocks=2 on v7x so both
    TensorCores of the chip get a 'parallel' grid step.
    """
    wq, wk, wv, gamma, beta, w1, b1, w2, b2 = params
    S, B, Din = x_sbd.shape
    Dout = wq.shape[1]
    assert B % batch_blocks == 0, (B, batch_blocks)
    bb = B // batch_blocks

    # PyTorch: x.transpose(0, 1) -> (batch, seq, in_size).  Fused under jit.
    x_bsd = jnp.transpose(x_sbd, (1, 0, 2))

    kernel = functools.partial(_attention_kernel, if_res=if_res)

    itemsize = jnp.dtype(x_sbd.dtype).itemsize
    flops = (2 * B * S * Din * Dout * 3          # Q, K, V projections
             + 2 * B * S * S * Dout * 2          # scores + attn @ v
             + 2 * B * S * Dout * Dout * 2)      # two MLP linears
    bytes_accessed = (B * S * Din * itemsize + B * S * Dout * itemsize
                      + sum(int(p.size) * jnp.dtype(p.dtype).itemsize for p in params))
    cost = pl.CostEstimate(flops=flops,
                           transcendentals=B * S * S,   # exp in softmax
                           bytes_accessed=bytes_accessed)

    # NOTE: output last dim (Dout=32) < 128 lanes -> masked stores, but the
    # total output is tiny here; lane-packing would force an in-kernel relayout
    # (sublane->lane reshape), so it is intentionally not done.
    out_bsd = pl.pallas_call(
        kernel,
        out_shape=jax.ShapeDtypeStruct((B, S, Dout), x_sbd.dtype),
        grid_spec=pltpu.PrefetchScalarGridSpec(
            num_scalar_prefetch=0,
            grid=(batch_blocks,),
            in_specs=[
                pl.BlockSpec((bb, S, Din), lambda b: (b, 0, 0)),     # x
                pl.BlockSpec((Din, Dout), lambda b: (0, 0)),         # Wq
                pl.BlockSpec((Din, Dout), lambda b: (0, 0)),         # Wk
                pl.BlockSpec((Din, Dout), lambda b: (0, 0)),         # Wv
                pl.BlockSpec((1, Dout), lambda b: (0, 0)),           # LN gamma
                pl.BlockSpec((1, Dout), lambda b: (0, 0)),           # LN beta
                pl.BlockSpec((Dout, Dout), lambda b: (0, 0)),        # W1
                pl.BlockSpec((1, Dout), lambda b: (0, 0)),           # b1
                pl.BlockSpec((Dout, Dout), lambda b: (0, 0)),        # W2
                pl.BlockSpec((1, Dout), lambda b: (0, 0)),           # b2
            ],
            out_specs=pl.BlockSpec((bb, S, Dout), lambda b: (b, 0, 0)),
        ),
        compiler_params=pltpu.CompilerParams(
            dimension_semantics=("parallel",)),
        cost_estimate=cost,
    )(x_bsd, wq, wk, wv, gamma, beta, w1, b1, w2, b2)

    # output.transpose(0, 1) -> (seq, batch, out_size).  Fused under jit.
    return jnp.transpose(out_bsd, (1, 0, 2))


def init_params(key, in_size, out_size, dtype=jnp.float32):
    """Deterministic synthetic parameters matching the module's shapes.
    Linear weights stored transposed: (in_features, out_features)."""
    ks = jax.random.split(key, 6)
    scale_in = 1.0 / (in_size ** 0.5)
    scale_out = 1.0 / (out_size ** 0.5)
    wq = jax.random.uniform(ks[0], (in_size, out_size), dtype, -scale_in, scale_in)
    wk = jax.random.uniform(ks[1], (in_size, out_size), dtype, -scale_in, scale_in)
    wv = jax.random.uniform(ks[2], (in_size, out_size), dtype, -scale_in, scale_in)
    gamma = jnp.ones((1, out_size), dtype)
    beta = jnp.zeros((1, out_size), dtype)
    w1 = jax.random.uniform(ks[3], (out_size, out_size), dtype, -scale_out, scale_out)
    b1 = jax.random.uniform(ks[4], (1, out_size), dtype, -scale_out, scale_out)
    w2 = jax.random.uniform(ks[5], (out_size, out_size), dtype, -scale_out, scale_out)
    b2 = jnp.zeros((1, out_size), dtype)
    return (wq, wk, wv, gamma, beta, w1, b1, w2, b2)


if __name__ == "__main__":
    seq, batch, in_size, out_size = 8, 2, 16, 32

    key = jax.random.PRNGKey(0)
    kx, kp = jax.random.split(key)

    x = jax.random.normal(kx, (seq, batch, in_size), dtype=jnp.float32)
    params = init_params(kp, in_size, out_size)

    out_plain = jax.block_until_ready(attention_forward(x, params, if_res=False))
    out_res = jax.block_until_ready(attention_forward(x, params, if_res=True))

    assert out_plain.shape == (seq, batch, out_size), out_plain.shape
    assert out_res.shape == (seq, batch, out_size), out_res.shape

    # Pure-JAX reference (eval-mode dropout = identity).
    def ref(x_sbd, if_res):
        wq, wk, wv, gamma, beta, w1, b1, w2, b2 = params
        xb = jnp.transpose(x_sbd, (1, 0, 2))
        q = xb @ wq
        k = xb @ wk
        v = xb @ wv
        attn = jnp.einsum('bqd,bkd->bqk', q / (out_size ** 0.5), k)
        attn = jax.nn.softmax(attn, axis=-1)
        res = jnp.einsum('bqk,bkd->bqd', attn, v)
        mean = res.mean(-1, keepdims=True)
        var = ((res - mean) ** 2).mean(-1, keepdims=True)
        ln = (res - mean) * lax.rsqrt(var + 1e-5) * gamma + beta
        h = jnp.maximum(ln @ w1 + b1, 0.0)
        o = h @ w2 + b2
        if if_res:
            o = o + res
        return jnp.transpose(o, (1, 0, 2))

    # Tolerance loosened slightly vs 1e-4 because the softmax denominator uses
    # the EUP approximate reciprocal (pl.reciprocal(approx=True)).
    assert jnp.allclose(out_plain, ref(x, False), atol=5e-3, rtol=5e-3)
    assert jnp.allclose(out_res, ref(x, True), atol=5e-3, rtol=5e-3)

    print("KERNEL_OK")
</pallas_src>

<mosaic_0001>
module attributes {stable_mosaic.version = 11 : i64} {
  func.func @_attention_kernel(%arg0: i32, %arg1: memref<2x8x16xf32, #tpu.memory_space<vmem>>, %arg2: memref<16x32xf32, #tpu.memory_space<vmem>>, %arg3: memref<16x32xf32, #tpu.memory_space<vmem>>, %arg4: memref<16x32xf32, #tpu.memory_space<vmem>>, %arg5: memref<1x32xf32, #tpu.memory_space<vmem>>, %arg6: memref<1x32xf32, #tpu.memory_space<vmem>>, %arg7: memref<32x32xf32, #tpu.memory_space<vmem>>, %arg8: memref<1x32xf32, #tpu.memory_space<vmem>>, %arg9: memref<32x32xf32, #tpu.memory_space<vmem>>, %arg10: memref<1x32xf32, #tpu.memory_space<vmem>>, %arg11: memref<2x8x32xf32, #tpu.memory_space<vmem>>) attributes {dimension_semantics = [#tpu.dimension_semantics<parallel>], iteration_bounds = array<i64: 1>, scalar_prefetch = 0 : i64, scratch_operands = 0 : i64, tpu.core_type = #tpu.core_type<tc>, window_params = [{transform_indices = @transform_0, window_bounds = array<i64: 2, 8, 16>}, {pipeline_mode = #tpu.pipeline_mode<synchronous>, transform_indices = @transform_1, window_bounds = array<i64: 16, 32>}, {pipeline_mode = #tpu.pipeline_mode<synchronous>, transform_indices = @transform_2, window_bounds = array<i64: 16, 32>}, {pipeline_mode = #tpu.pipeline_mode<synchronous>, transform_indices = @transform_3, window_bounds = array<i64: 16, 32>}, {pipeline_mode = #tpu.pipeline_mode<synchronous>, transform_indices = @transform_4, window_bounds = array<i64: 1, 32>}, {pipeline_mode = #tpu.pipeline_mode<synchronous>, transform_indices = @transform_5, window_bounds = array<i64: 1, 32>}, {pipeline_mode = #tpu.pipeline_mode<synchronous>, transform_indices = @transform_6, window_bounds = array<i64: 32, 32>}, {pipeline_mode = #tpu.pipeline_mode<synchronous>, transform_indices = @transform_7, window_bounds = array<i64: 1, 32>}, {pipeline_mode = #tpu.pipeline_mode<synchronous>, transform_indices = @transform_8, window_bounds = array<i64: 32, 32>}, {pipeline_mode = #tpu.pipeline_mode<synchronous>, transform_indices = @transform_9, window_bounds = array<i64: 1, 32>}, {transform_indices = @transform_10, window_bounds = array<i64: 2, 8, 32>}]} {
    %c0 = arith.constant 0 : index
    %c0_0 = arith.constant 0 : index
    %c0_1 = arith.constant 0 : index
    %0 = vector.load %arg1[%c0, %c0_0, %c0_1] : memref<2x8x16xf32, #tpu.memory_space<vmem>>, vector<2x8x16xf32>
    %1 = vector.shape_cast %0 : vector<2x8x16xf32> to vector<16x16xf32>
    %c0_2 = arith.constant 0 : index
    %c0_3 = arith.constant 0 : index
    %2 = vector.load %arg2[%c0_2, %c0_3] : memref<16x32xf32, #tpu.memory_space<vmem>>, vector<16x32xf32>
    %cst = arith.constant dense<0.000000e+00> : vector<16x32xf32>
    %3 = tpu.matmul %1, %2, %cst {dimension_numbers = #tpu.dot_dimension_numbers<[1], [0], [0], [1], [0, 0, 1, 1], [], []>} : vector<16x16xf32>, vector<16x32xf32>, vector<16x32xf32> -> vector<16x32xf32>
    %c0_4 = arith.constant 0 : index
    %c0_5 = arith.constant 0 : index
    %4 = vector.load %arg3[%c0_4, %c0_5] : memref<16x32xf32, #tpu.memory_space<vmem>>, vector<16x32xf32>
    %cst_6 = arith.constant dense<0.000000e+00> : vector<16x32xf32>
    %5 = tpu.matmul %1, %4, %cst_6 {dimension_numbers = #tpu.dot_dimension_numbers<[1], [0], [0], [1], [0, 0, 1, 1], [], []>} : vector<16x16xf32>, vector<16x32xf32>, vector<16x32xf32> -> vector<16x32xf32>
    %c0_7 = arith.constant 0 : index
    %c0_8 = arith.constant 0 : index
    %6 = vector.load %arg4[%c0_7, %c0_8] : memref<16x32xf32, #tpu.memory_space<vmem>>, vector<16x32xf32>
    %cst_9 = arith.constant dense<0.000000e+00> : vector<16x32xf32>
    %7 = tpu.matmul %1, %6, %cst_9 {dimension_numbers = #tpu.dot_dimension_numbers<[1], [0], [0], [1], [0, 0, 1, 1], [], []>} : vector<16x16xf32>, vector<16x32xf32>, vector<16x32xf32> -> vector<16x32xf32>
    %8 = vector.shape_cast %3 : vector<16x32xf32> to vector<2x8x32xf32>
    %9 = vector.shape_cast %5 : vector<16x32xf32> to vector<2x8x32xf32>
    %10 = vector.shape_cast %7 : vector<16x32xf32> to vector<2x8x32xf32>
    %cst_10 = arith.constant 0.176776692 : f32
    %11 = vector.broadcast %cst_10 : f32 to vector<2x8x32xf32>
    %12 = arith.mulf %8, %11 : vector<2x8x32xf32>
    "tpu.trace_start"() <{level = 10 : i32, message = "bqd,bkd->bqk"}> : () -> ()
    %cst_11 = arith.constant dense<0.000000e+00> : vector<2x8x8xf32>
    %13 = tpu.matmul %12, %9, %cst_11 {dimension_numbers = #tpu.dot_dimension_numbers<[2], [2], [1], [1], [0, 0, 0, 1, 1, 1], [0], [0]>} : vector<2x8x32xf32>, vector<2x8x32xf32>, vector<2x8x8xf32> -> vector<2x8x8xf32>
    "tpu.trace_stop"() : () -> ()
    %cst_12 = arith.constant dense<0xFF800000> : vector<2x8xf32>
    %14 = vector.multi_reduction <maximumf>, %13, %cst_12 [2] : vector<2x8x8xf32> to vector<2x8xf32>
    %15 = vector.shape_cast %14 : vector<2x8xf32> to vector<2x8x1xf32>
    %16 = vector.broadcast %15 : vector<2x8x1xf32> to vector<2x8x8xf32>
    %17 = arith.subf %13, %16 : vector<2x8x8xf32>
    %18 = math.exp %17 : vector<2x8x8xf32>
    %cst_13 = arith.constant dense<0.000000e+00> : vector<2x8xf32>
    %19 = vector.multi_reduction <add>, %18, %cst_13 [2] : vector<2x8x8xf32> to vector<2x8xf32>
    %20 = vector.shape_cast %19 : vector<2x8xf32> to vector<2x8x1xf32>
    %21 = tpu.reciprocal %20 {approx = true} : vector<2x8x1xf32> -> vector<2x8x1xf32>
    %22 = vector.broadcast %21 : vector<2x8x1xf32> to vector<2x8x8xf32>
    %23 = arith.mulf %18, %22 : vector<2x8x8xf32>
    "tpu.trace_start"() <{level = 10 : i32, message = "bqk,bkd->bqd"}> : () -> ()
    %cst_14 = arith.constant dense<0.000000e+00> : vector<2x8x32xf32>
    %24 = tpu.matmul %23, %10, %cst_14 {dimension_numbers = #tpu.dot_dimension_numbers<[2], [1], [1], [2], [0, 0, 0, 1, 1, 2], [0], [0]>} : vector<2x8x8xf32>, vector<2x8x32xf32>, vector<2x8x32xf32> -> vector<2x8x32xf32>
    "tpu.trace_stop"() : () -> ()
    %25 = vector.shape_cast %24 : vector<2x8x32xf32> to vector<16x32xf32>
    %cst_15 = arith.constant dense<0.000000e+00> : vector<16xf32>
    %26 = vector.multi_reduction <add>, %25, %cst_15 [1] : vector<16x32xf32> to vector<16xf32>
    %27 = vector.shape_cast %26 : vector<16xf32> to vector<16x1xf32>
    %cst_16 = arith.constant 3.200000e+01 : f32
    %28 = vector.broadcast %cst_16 : f32 to vector<16x1xf32>
    %29 = arith.divf %27, %28 : vector<16x1xf32>
    %30 = vector.broadcast %29 : vector<16x1xf32> to vector<16x32xf32>
    %31 = arith.subf %25, %30 : vector<16x32xf32>
    %32 = arith.mulf %31, %31 : vector<16x32xf32>
    %cst_17 = arith.constant dense<0.000000e+00> : vector<16xf32>
    %33 = vector.multi_reduction <add>, %32, %cst_17 [1] : vector<16x32xf32> to vector<16xf32>
    %34 = vector.shape_cast %33 : vector<16xf32> to vector<16x1xf32>
    %cst_18 = arith.constant 3.200000e+01 : f32
    %35 = vector.broadcast %cst_18 : f32 to vector<16x1xf32>
    %36 = arith.divf %34, %35 : vector<16x1xf32>
    %cst_19 = arith.constant 9.99999974E-6 : f32
    %37 = vector.broadcast %cst_19 : f32 to vector<16x1xf32>
    %38 = arith.addf %36, %37 : vector<16x1xf32>
    %39 = math.rsqrt %38 : vector<16x1xf32>
    %40 = vector.broadcast %39 : vector<16x1xf32> to vector<16x32xf32>
    %41 = arith.mulf %31, %40 : vector<16x32xf32>
    %c0_20 = arith.constant 0 : index
    %c0_21 = arith.constant 0 : index
    %42 = vector.load %arg5[%c0_20, %c0_21] : memref<1x32xf32, #tpu.memory_space<vmem>>, vector<1x32xf32>
    %43 = vector.broadcast %42 : vector<1x32xf32> to vector<16x32xf32>
    %44 = arith.mulf %41, %43 : vector<16x32xf32>
    %c0_22 = arith.constant 0 : index
    %c0_23 = arith.constant 0 : index
    %45 = vector.load %arg6[%c0_22, %c0_23] : memref<1x32xf32, #tpu.memory_space<vmem>>, vector<1x32xf32>
    %46 = vector.broadcast %45 : vector<1x32xf32> to vector<16x32xf32>
    %47 = arith.addf %44, %46 : vector<16x32xf32>
    %c0_24 = arith.constant 0 : index
    %c0_25 = arith.constant 0 : index
    %48 = vector.load %arg7[%c0_24, %c0_25] : memref<32x32xf32, #tpu.memory_space<vmem>>, vector<32x32xf32>
    %cst_26 = arith.constant dense<0.000000e+00> : vector<16x32xf32>
    %49 = tpu.matmul %47, %48, %cst_26 {dimension_numbers = #tpu.dot_dimension_numbers<[1], [0], [0], [1], [0, 0, 1, 1], [], []>} : vector<16x32xf32>, vector<32x32xf32>, vector<16x32xf32> -> vector<16x32xf32>
    %c0_27 = arith.constant 0 : index
    %c0_28 = arith.constant 0 : index
    %50 = vector.load %arg8[%c0_27, %c0_28] : memref<1x32xf32, #tpu.memory_space<vmem>>, vector<1x32xf32>
    %51 = vector.broadcast %50 : vector<1x32xf32> to vector<16x32xf32>
    %52 = arith.addf %49, %51 : vector<16x32xf32>
    %cst_29 = arith.constant 0.000000e+00 : f32
    %53 = vector.broadcast %cst_29 : f32 to vector<16x32xf32>
    %54 = arith.maximumf %52, %53 : vector<16x32xf32>
    %c0_30 = arith.constant 0 : index
    %c0_31 = arith.constant 0 : index
    %55 = vector.load %arg9[%c0_30, %c0_31] : memref<32x32xf32, #tpu.memory_space<vmem>>, vector<32x32xf32>
    %cst_32 = arith.constant dense<0.000000e+00> : vector<16x32xf32>
    %56 = tpu.matmul %54, %55, %cst_32 {dimension_numbers = #tpu.dot_dimension_numbers<[1], [0], [0], [1], [0, 0, 1, 1], [], []>} : vector<16x32xf32>, vector<32x32xf32>, vector<16x32xf32> -> vector<16x32xf32>
    %c0_33 = arith.constant 0 : index
    %c0_34 = arith.constant 0 : index
    %57 = vector.load %arg10[%c0_33, %c0_34] : memref<1x32xf32, #tpu.memory_space<vmem>>, vector<1x32xf32>
    %58 = vector.broadcast %57 : vector<1x32xf32> to vector<16x32xf32>
    %59 = arith.addf %56, %58 : vector<16x32xf32>
    %60 = vector.shape_cast %59 : vector<16x32xf32> to vector<2x8x32xf32>
    %c0_35 = arith.constant 0 : index
    %c0_36 = arith.constant 0 : index
    %c0_37 = arith.constant 0 : index
    %61 = vector.load %arg11[%c0_35, %c0_36, %c0_37] : memref<2x8x32xf32, #tpu.memory_space<vmem>>, vector<2x8x32xf32>
    tpu.vector_store %arg11[%c0_35, %c0_36, %c0_37], %60 {strides = array<i32>} : memref<2x8x32xf32, #tpu.memory_space<vmem>>, vector<2x8x32xf32>,
    return
  }
  func.func @transform_0(%arg0: i32) -> (i32, i32, i32) {
    %c0_i32 = arith.constant 0 : i32
    %c0_i32_0 = arith.constant 0 : i32
    %c0_i32_1 = arith.constant 0 : i32
    return %arg0, %c0_i32, %c0_i32_0 : i32, i32, i32
  }
  func.func @transform_1(%arg0: i32) -> (i32, i32) {
    %c0_i32 = arith.constant 0 : i32
    %c0_i32_0 = arith.constant 0 : i32
    %c0_i32_1 = arith.constant 0 : i32
    return %c0_i32, %c0_i32_0 : i32, i32
  }
  func.func @transform_2(%arg0: i32) -> (i32, i32) {
    %c0_i32 = arith.constant 0 : i32
    %c0_i32_0 = arith.constant 0 : i32
    %c0_i32_1 = arith.constant 0 : i32
    return %c0_i32, %c0_i32_0 : i32, i32
  }
  func.func @transform_3(%arg0: i32) -> (i32, i32) {
    %c0_i32 = arith.constant 0 : i32
    %c0_i32_0 = arith.constant 0 : i32
    %c0_i32_1 = arith.constant 0 : i32
    return %c0_i32, %c0_i32_0 : i32, i32
  }
  func.func @transform_4(%arg0: i32) -> (i32, i32) {
    %c0_i32 = arith.constant 0 : i32
    %c0_i32_0 = arith.constant 0 : i32
    %c0_i32_1 = arith.constant 0 : i32
    return %c0_i32, %c0_i32_0 : i32, i32
  }
  func.func @transform_5(%arg0: i32) -> (i32, i32) {
    %c0_i32 = arith.constant 0 : i32
    %c0_i32_0 = arith.constant 0 : i32
    %c0_i32_1 = arith.constant 0 : i32
    return %c0_i32, %c0_i32_0 : i32, i32
  }
  func.func @transform_6(%arg0: i32) -> (i32, i32) {
    %c0_i32 = arith.constant 0 : i32
    %c0_i32_0 = arith.constant 0 : i32
    %c0_i32_1 = arith.constant 0 : i32
    return %c0_i32, %c0_i32_0 : i32, i32
  }
  func.func @transform_7(%arg0: i32) -> (i32, i32) {
    %c0_i32 = arith.constant 0 : i32
    %c0_i32_0 = arith.constant 0 : i32
    %c0_i32_1 = arith.constant 0 : i32
    return %c0_i32, %c0_i32_0 : i32, i32
  }
  func.func @transform_8(%arg0: i32) -> (i32, i32) {
    %c0_i32 = arith.constant 0 : i32
    %c0_i32_0 = arith.constant 0 : i32
    %c0_i32_1 = arith.constant 0 : i32
    return %c0_i32, %c0_i32_0 : i32, i32
  }
  func.func @transform_9(%arg0: i32) -> (i32, i32) {
    %c0_i32 = arith.constant 0 : i32
    %c0_i32_0 = arith.constant 0 : i32
    %c0_i32_1 = arith.constant 0 : i32
    return %c0_i32, %c0_i32_0 : i32, i32
  }
  func.func @transform_10(%arg0: i32) -> (i32, i32, i32) {
    %c0_i32 = arith.constant 0 : i32
    %c0_i32_0 = arith.constant 0 : i32
    %c0_i32_1 = arith.constant 0 : i32
    return %arg0, %c0_i32, %c0_i32_0 : i32, i32, i32
  }
}

</mosaic_0001>

<llo_original>
// kernel: attention_forward.1
$region0: #{attention_forward.1}
  #allocation0 [shape = 'u32[]', space=smem, size = 0x4, offset = 0x4, fixed_abs, tag = 'smem constant byte address 0x4 - core index']
  #allocation1 [shape = 'u32[72,128]{1,0:T(1,128)}', space=vmem, size = 0x9000, scoped, tag = 'internal scratch']
  %s0 = inlined_call_operand.vmem [shape: f32[2,8,16], index: 0, kind: input, shape index: {}]
  %s1 = inlined_call_operand.hbm [shape: f32[16,32], index: 1, kind: input, shape index: {}]
  %s2 = inlined_call_operand.hbm [shape: f32[16,32], index: 2, kind: input, shape index: {}]
  %s3 = inlined_call_operand.hbm [shape: f32[16,32], index: 3, kind: input, shape index: {}]
  %s4 = inlined_call_operand.vmem [shape: f32[1,32], index: 4, kind: input, shape index: {}]
  %s5 = inlined_call_operand.vmem [shape: f32[1,32], index: 5, kind: input, shape index: {}]
  %s6 = inlined_call_operand.vmem [shape: f32[32,32], index: 6, kind: input, shape index: {}]
  %s7 = inlined_call_operand.vmem [shape: f32[1,32], index: 7, kind: input, shape index: {}]
  %s8 = inlined_call_operand.hbm [shape: f32[32,32], index: 8, kind: input, shape index: {}]
  %s9 = inlined_call_operand.vmem [shape: f32[1,32], index: 9, kind: input, shape index: {}]
  %s10 = inlined_call_operand.vmem [shape: f32[2,8,32], index: 10, kind: output, shape index: {}]
  %s11 = sld [smem:[#allocation0]]
  $region66: #{attention_forward.1} parent=0
    _
  %s13 = ssub.s32 1, %s11
  %s14 = scalar_select 0, %s13, %s11
  $region1: #{attention_forward.1} parent=0
    #allocation2 [shape = 'u8[8192]{0}', space=vmem, size = 0x2000, scoped, tag = 'input window, operand 1, single buffered']
    #allocation3 [shape = 's32[1]{0}', space=sflag, size = 0x4, scoped, tag = 'scoped memory for attention_forward.1']
    #allocation4 [shape = 'u8[8192]{0}', space=vmem, size = 0x2000, scoped, tag = 'input window, operand 2, single buffered']
    #allocation5 [shape = 's32[1]{0}', space=sflag, size = 0x4, scoped, tag = 'scoped memory for attention_forward.1']
    #allocation6 [shape = 'u8[8192]{0}', space=vmem, size = 0x2000, scoped, tag = 'input window, operand 3, single buffered']
    #allocation7 [shape = 'u8[16384]{0}', space=vmem, size = 0x4000, scoped, tag = 'input window, operand 8, single buffered']
    #allocation8 [shape = 's32[1]{0}', space=sflag, size = 0x4, scoped, tag = 'scoped memory for attention_forward.1']
    %15 = vsyncpa [#allocation3], 0
    %16 = vsyncpa [#allocation5], 0
    %17 = vsyncpa [#allocation8], 0
    // Predicated region
    $region2: #{attention_forward.1} parent=1 // pred_check
      _
    $region3: #{attention_forward.1} parent=1 // pred_check_branch
      %19 = sbr.rel (0) target = $region5
    $region4: #{attention_forward.1} parent=1 // pred_region
      _
    $region5: #{attention_forward.1} parent=1 // pred_fallthru
      _
    // Predicated region
    $region6: #{attention_forward.1} parent=1 // pred_check
      _
    $region7: #{attention_forward.1} parent=1 // pred_check_branch
      %21 = sbr.rel (0) target = $region9
    $region8: #{attention_forward.1} parent=1 // pred_region
      %23 = vsyncadd [#allocation3], 0
      %s24 = sshll.u32 %s1, 4
      %s25 = int_to_ptr.hbm [resolvable:$true] %s24
      %s26 = sshll.u32 [#allocation2], 4
      %s27 = int_to_ptr.vmem [resolvable:$true] %s26
      %32 = dma.hbm_to_vmem [thread:$0]  %s25, 256, %s27, [#allocation3], 128, 128, 8
    $region9: #{attention_forward.1} parent=1 // pred_fallthru
      _
    // Predicated region
    $region10: #{attention_forward.1} parent=1 // pred_check
      _
    $region11: #{attention_forward.1} parent=1 // pred_check_branch
      %34 = sbr.rel (0) target = $region13
    $region12: #{attention_forward.1} parent=1 // pred_region
      %36 = vsyncadd [#allocation5], 0
      %s37 = sshll.u32 %s2, 4
      %s38 = int_to_ptr.hbm [resolvable:$true] %s37
      %s39 = sshll.u32 [#allocation4], 4
      %s40 = int_to_ptr.vmem [resolvable:$true] %s39
      %45 = dma.hbm_to_vmem [thread:$0]  %s38, 256, %s40, [#allocation5], 128, 128, 8
    $region13: #{attention_forward.1} parent=1 // pred_fallthru
      _
    // Predicated region
    $region14: #{attention_forward.1} parent=1 // pred_check
      _
    $region15: #{attention_forward.1} parent=1 // pred_check_branch
      %47 = sbr.rel (0) target = $region17
    $region16: #{attention_forward.1} parent=1 // pred_region
      %49 = vsyncadd [#allocation5], 0
      %s50 = sshll.u32 %s3, 4
      %s51 = int_to_ptr.hbm [resolvable:$true] %s50
      %s52 = sshll.u32 [#allocation6], 4
      %s53 = int_to_ptr.vmem [resolvable:$true] %s52
      %58 = dma.hbm_to_vmem [thread:$0]  %s51, 256, %s53, [#allocation5], 128, 128, 8
    $region17: #{attention_forward.1} parent=1 // pred_fallthru
      _
    // Predicated region
    $region18: #{attention_forward.1} parent=1 // pred_check
      _
    $region19: #{attention_forward.1} parent=1 // pred_check_branch
      %60 = sbr.rel (0) target = $region21
    $region20: #{attention_forward.1} parent=1 // pred_region
      _
    $region21: #{attention_forward.1} parent=1 // pred_fallthru
      _
    // Predicated region
    $region22: #{attention_forward.1} parent=1 // pred_check
      _
    $region23: #{attention_forward.1} parent=1 // pred_check_branch
      %62 = sbr.rel (0) target = $region25
    $region24: #{attention_forward.1} parent=1 // pred_region
      _
    $region25: #{attention_forward.1} parent=1 // pred_fallthru
      _
    // Predicated region
    $region26: #{attention_forward.1} parent=1 // pred_check
      _
    $region27: #{attention_forward.1} parent=1 // pred_check_branch
      %64 = sbr.rel (0) target = $region29
    $region28: #{attention_forward.1} parent=1 // pred_region
      _
    $region29: #{attention_forward.1} parent=1 // pred_fallthru
      _
    // Predicated region
    $region30: #{attention_forward.1} parent=1 // pred_check
      _
    $region31: #{attention_forward.1} parent=1 // pred_check_branch
      %66 = sbr.rel (0) target = $region33
    $region32: #{attention_forward.1} parent=1 // pred_region
      _
    $region33: #{attention_forward.1} parent=1 // pred_fallthru
      _
    // Predicated region
    $region34: #{attention_forward.1} parent=1 // pred_check
      _
    $region35: #{attention_forward.1} parent=1 // pred_check_branch
      %68 = sbr.rel (0) target = $region37
    $region36: #{attention_forward.1} parent=1 // pred_region
      %70 = vsyncadd [#allocation8], 0
      %s71 = sshll.u32 %s8, 4
      %s72 = int_to_ptr.hbm [resolvable:$true] %s71
      %s73 = sshll.u32 [#allocation7], 4
      %s74 = int_to_ptr.vmem [resolvable:$true] %s73
      %79 = dma.hbm_to_vmem [thread:$0]  %s72, 512, %s74, [#allocation8], 128, 128, 8
    $region37: #{attention_forward.1} parent=1 // pred_fallthru
      _
    // Predicated region
    $region38: #{attention_forward.1} parent=1 // pred_check
      _
    $region39: #{attention_forward.1} parent=1 // pred_check_branch
      %81 = sbr.rel (0) target = $region41
    $region40: #{attention_forward.1} parent=1 // pred_region
      _
    $region41: #{attention_forward.1} parent=1 // pred_fallthru
      _
    // Predicated region
    $region42: #{attention_forward.1} parent=1 // pred_check
      _
    $region43: #{attention_forward.1} parent=1 // pred_check_branch
      %83 = sbr.rel (0) target = $region45
    $region44: #{attention_forward.1} parent=1 // pred_region
      %85 = dma.done [#allocation3], 256
    $region45: #{attention_forward.1} parent=1 // pred_fallthru
      _
    // Predicated region
    $region46: #{attention_forward.1} parent=1 // pred_check
      _
    $region47: #{attention_forward.1} parent=1 // pred_check_branch
      %87 = sbr.rel (0) target = $region49
    $region48: #{attention_forward.1} parent=1 // pred_region
      %89 = dma.done [#allocation5], 256
    $region49: #{attention_forward.1} parent=1 // pred_fallthru
      _
    // Predicated region
    $region50: #{attention_forward.1} parent=1 // pred_check
      _
    $region51: #{attention_forward.1} parent=1 // pred_check_branch
      %91 = sbr.rel (0) target = $region53
    $region52: #{attention_forward.1} parent=1 // pred_region
      %93 = dma.done [#allocation5], 256
    $region53: #{attention_forward.1} parent=1 // pred_fallthru
      _
    // Predicated region
    $region54: #{attention_forward.1} parent=1 // pred_check
      _
    $region55: #{attention_forward.1} parent=1 // pred_check_branch
      %95 = sbr.rel (0) target = $region57
    $region56: #{attention_forward.1} parent=1 // pred_region
      %97 = dma.done [#allocation8], 512
    $region57: #{attention_forward.1} parent=1 // pred_fallthru
      _
    %v98 = vld [vmem:[%s0] sm:$0xff]
    %v99 = vld [vmem:[%s0 + $0x8] sm:$0xff]
    %v100 = vld [vmem:[#allocation2] sm:$0xff]
    %v101 = vld [vmem:[#allocation2 + $0x8] sm:$0xff]
    %vm102 = vcmask 130048
    %v104 = vsel %vm102, %v98, 0
    %v107 = vsel %vm102, %v99, 0
    %109 = vmatpush.msra.mxu0 0.0
    %110 = vmatpush.msra.mxu0 0.0
    %111 = vmatpush.msra.mxu0 0.0
    %112 = vmatpush.msra.mxu0 0.0
    %113 = vmatpush.msra.mxu0 0.0
    %114 = vmatpush.msra.mxu0 0.0
    %115 = vmatpush.msra.mxu0 0.0
    %116 = vmatpush.msra.mxu0 0.0
    %117 = vmatpush.msra.mxu0 0.0
    %118 = vmatpush.msra.mxu0 0.0
    %119 = vmatpush.msra.mxu0 0.0
    %120 = vmatpush.msra.mxu0 0.0
    %121 = vmatpush.msra.mxu0 0.0
    %122 = vmatpush.msra.mxu0 0.0
    %123 = vmatpush.msra.mxu0 %v101
    %124 = vmatpush.msra.mxu0 %v100
    %125 = vmatmul.f32.gmra.mxu0 %v104
    %v126 = vpop.f32.mrf.mxu0
    %v127 = vadd.f32 0.0, %v126
    %128 = vmatmul.f32.gmra.mxu0 %v107
    %v129 = vpop.f32.mrf.mxu0
    %v130 = vadd.f32 0.0, %v129
    %131 = vdwg.mxu0
    %v132 = vld [vmem:[#allocation4] sm:$0xff]
    %v133 = vld [vmem:[#allocation4 + $0x8] sm:$0xff]
    %134 = vmatpush.msra.mxu0 0.0
    %135 = vmatpush.msra.mxu0 0.0
    %136 = vmatpush.msra.mxu0 0.0
    %137 = vmatpush.msra.mxu0 0.0
    %138 = vmatpush.msra.mxu0 0.0
    %139 = vmatpush.msra.mxu0 0.0
    %140 = vmatpush.msra.mxu0 0.0
    %141 = vmatpush.msra.mxu0 0.0
    %142 = vmatpush.msra.mxu0 0.0
    %143 = vmatpush.msra.mxu0 0.0
    %144 = vmatpush.msra.mxu0 0.0
    %145 = vmatpush.msra.mxu0 0.0
    %146 = vmatpush.msra.mxu0 0.0
    %147 = vmatpush.msra.mxu0 0.0
    %148 = vmatpush.msra.mxu0 %v133
    %149 = vmatpush.msra.mxu0 %v132
    %150 = vmatmul.f32.gmra.mxu0 %v104
    %v151 = vpop.f32.mrf.mxu0
    %v152 = vadd.f32 0.0, %v151
    %153 = vmatmul.f32.gmra.mxu0 %v107
    %v154 = vpop.f32.mrf.mxu0
    %v155 = vadd.f32 0.0, %v154
    %156 = vdwg.mxu0
    %v157 = vld [vmem:[#allocation6] sm:$0xff]
    %v158 = vld [vmem:[#allocation6 + $0x8] sm:$0xff]
    %159 = vmatpush.msra.mxu0 0.0
    %160 = vmatpush.msra.mxu0 0.0
    %161 = vmatpush.msra.mxu0 0.0
    %162 = vmatpush.msra.mxu0 0.0
    %163 = vmatpush.msra.mxu0 0.0
    %164 = vmatpush.msra.mxu0 0.0
    %165 = vmatpush.msra.mxu0 0.0
    %166 = vmatpush.msra.mxu0 0.0
    %167 = vmatpush.msra.mxu0 0.0
    %168 = vmatpush.msra.mxu0 0.0
    %169 = vmatpush.msra.mxu0 0.0
    %170 = vmatpush.msra.mxu0 0.0
    %171 = vmatpush.msra.mxu0 0.0
    %172 = vmatpush.msra.mxu0 0.0
    %173 = vmatpush.msra.mxu0 %v158
    %174 = vmatpush.msra.mxu0 %v157
    %175 = vmatmul.f32.gmra.mxu0 %v104
    %v176 = vpop.f32.mrf.mxu0
    %v177 = vadd.f32 0.0, %v176
    %178 = vmatmul.f32.gmra.mxu0 %v107
    %v179 = vpop.f32.mrf.mxu0
    %v180 = vadd.f32 0.0, %v179
    %181 = vdwg.mxu0
    %v182 = vmul.f32 %v127, 0.17677669
    %v183 = vmul.f32 %v130, 0.17677669
    %vm184 = vcmask 261120
    %v186 = vsel %vm184, %v182, 0
    %v189 = vsel %vm184, %v152, 0
    %191 = vmatpush.xpose.msra.mxu0 0.0
    %192 = vmatpush.xpose.msra.mxu0 0.0
    %193 = vmatpush.xpose.msra.mxu0 0.0
    %194 = vmatpush.xpose.msra.mxu0 0.0
    %195 = vmatpush.xpose.msra.mxu0 0.0
    %196 = vmatpush.xpose.msra.mxu0 0.0
    %197 = vmatpush.xpose.msra.mxu0 0.0
    %198 = vmatpush.xpose.msra.mxu0 0.0
    %199 = vmatpush.xpose.msra.mxu0 0.0
    %200 = vmatpush.xpose.msra.mxu0 0.0
    %201 = vmatpush.xpose.msra.mxu0 0.0
    %202 = vmatpush.xpose.msra.mxu0 0.0
    %203 = vmatpush.xpose.msra.mxu0 0.0
    %204 = vmatpush.xpose.msra.mxu0 0.0
    %205 = vmatpush.xpose.msra.mxu0 0.0
    %206 = vmatpush.xpose.msra.mxu0 %v189
    %207 = vmatmul.f32.gmra.mxu0 %v186
    %v208 = vpop.f32.mrf.mxu0
    %v209 = vadd.f32 0.0, %v208
    %210 = vdwg.mxu0
    %v212 = vsel %vm184, %v183, 0
    %v215 = vsel %vm184, %v155, 0
    %217 = vmatpush.xpose.msra.mxu0 0.0
    %218 = vmatpush.xpose.msra.mxu0 0.0
    %219 = vmatpush.xpose.msra.mxu0 0.0
    %220 = vmatpush.xpose.msra.mxu0 0.0
    %221 = vmatpush.xpose.msra.mxu0 0.0
    %222 = vmatpush.xpose.msra.mxu0 0.0
    %223 = vmatpush.xpose.msra.mxu0 0.0
    %224 = vmatpush.xpose.msra.mxu0 0.0
    %225 = vmatpush.xpose.msra.mxu0 0.0
    %226 = vmatpush.xpose.msra.mxu0 0.0
    %227 = vmatpush.xpose.msra.mxu0 0.0
    %228 = vmatpush.xpose.msra.mxu0 0.0
    %229 = vmatpush.xpose.msra.mxu0 0.0
    %230 = vmatpush.xpose.msra.mxu0 0.0
    %231 = vmatpush.xpose.msra.mxu0 0.0
    %232 = vmatpush.xpose.msra.mxu0 %v215
    %233 = vmatmul.f32.gmra.mxu0 %v212
    %v234 = vpop.f32.mrf.mxu0
    %v235 = vadd.f32 0.0, %v234
    %236 = vdwg.mxu0
    %vm237 = vcmask 64512
    %v238 = vsel %vm237, %v209, -inf
    %239 = vmax.xlane.f32.xlu0 %v238
    %v240 = vpop.xlane.xlu0 %239
    %v241 = vsel %vm237, %v235, -inf
    %242 = vmax.xlane.f32.xlu0 %v241
    %v243 = vpop.xlane.xlu0 %242
    %v244 = vsub.f32 %v209, %v240
    %v245 = vsub.f32 %v235, %v243
    %v246 = vmul.f32 %v244, 1.442695
    %v247 = vpow.pop %v246
    %v248 = vmul.f32 %v245, 1.442695
    %v249 = vpow.pop %v248
    %v250 = vsel %vm237, %v247, 0.0
    %251 = vadd.xlane.f32.xlu0 %v250
    %v252 = vpop.xlane.xlu0 %251
    %v253 = vsel %vm237, %v249, 0.0
    %254 = vadd.xlane.f32.xlu0 %v253
    %v255 = vpop.xlane.xlu0 %254
    %v256 = vrcp.pop %v252
    %v257 = vrcp.pop %v255
    %v258 = vmul.f32 %v247, %v256
    %v259 = vmul.f32 %v249, %v257
    %v261 = vsel %vm237, %v258, 0
    %263 = vmatpush.msra.mxu0 0.0
    %264 = vmatpush.msra.mxu0 0.0
    %265 = vmatpush.msra.mxu0 0.0
    %266 = vmatpush.msra.mxu0 0.0
    %267 = vmatpush.msra.mxu0 0.0
    %268 = vmatpush.msra.mxu0 0.0
    %269 = vmatpush.msra.mxu0 0.0
    %270 = vmatpush.msra.mxu0 0.0
    %271 = vmatpush.msra.mxu0 0.0
    %272 = vmatpush.msra.mxu0 0.0
    %273 = vmatpush.msra.mxu0 0.0
    %274 = vmatpush.msra.mxu0 0.0
    %275 = vmatpush.msra.mxu0 0.0
    %276 = vmatpush.msra.mxu0 0.0
    %277 = vmatpush.msra.mxu0 0.0
    %278 = vmatpush.msra.mxu0 %v177
    %279 = vmatmul.f32.gmra.mxu0 %v261
    %v280 = vpop.f32.mrf.mxu0
    %v281 = vadd.f32 0.0, %v280
    %282 = vdwg.mxu0
    %v284 = vsel %vm237, %v259, 0
    %286 = vmatpush.msra.mxu0 0.0
    %287 = vmatpush.msra.mxu0 0.0
    %288 = vmatpush.msra.mxu0 0.0
    %289 = vmatpush.msra.mxu0 0.0
    %290 = vmatpush.msra.mxu0 0.0
    %291 = vmatpush.msra.mxu0 0.0
    %292 = vmatpush.msra.mxu0 0.0
    %293 = vmatpush.msra.mxu0 0.0
    %294 = vmatpush.msra.mxu0 0.0
    %295 = vmatpush.msra.mxu0 0.0
    %296 = vmatpush.msra.mxu0 0.0
    %297 = vmatpush.msra.mxu0 0.0
    %298 = vmatpush.msra.mxu0 0.0
    %299 = vmatpush.msra.mxu0 0.0
    %300 = vmatpush.msra.mxu0 0.0
    %301 = vmatpush.msra.mxu0 %v180
    %302 = vmatmul.f32.gmra.mxu0 %v284
    %v303 = vpop.f32.mrf.mxu0
    %v304 = vadd.f32 0.0, %v303
    %305 = vdwg.mxu0
    %v306 = vsel %vm184, %v281, 0.0
    %307 = vadd.xlane.f32.xlu0 %v306
    %v308 = vpop.xlane.xlu0 %307
    %v309 = vsel %vm184, %v304, 0.0
    %310 = vadd.xlane.f32.xlu0 %v309
    %v311 = vpop.xlane.xlu0 %310
    %v312 = vrcp.pop 32.0
    %v313 = vmul.f32 32.0, %v312
    %v314 = vsub.f32 1.0, %v313
    %v315 = vmul.f32 %v312, %v314
    %v316 = vadd.f32 %v312, %v315
    %vm317 = vweird.f32 %v312
    %v318 = vsel %vm317, %v312, %v316
    %v319 = vmul.f32 %v308, %v318
    %v320 = vmul.f32 %v311, %v318
    %v321 = vsub.f32 %v281, %v319
    %v322 = vsub.f32 %v304, %v320
    %v323 = vmul.f32 %v321, %v321
    %v324 = vmul.f32 %v322, %v322
    %v325 = vsel %vm184, %v323, 0.0
    %326 = vadd.xlane.f32.xlu0 %v325
    %v327 = vpop.xlane.xlu0 %326
    %v328 = vsel %vm184, %v324, 0.0
    %329 = vadd.xlane.f32.xlu0 %v328
    %v330 = vpop.xlane.xlu0 %329
    %v331 = vmul.f32 %v327, %v318
    %v332 = vmul.f32 %v330, %v318
    %v333 = vadd.f32 %v331, 1e-05
    %v334 = vadd.f32 %v332, 1e-05
    %v335 = vrsqrt.pop %v333
    %v336 = vmul.f32 %v335, %v333
    %v337 = vmul.f32 %v336, %v335
    %v338 = vmul.f32 0.5, %v337
    %v339 = vsub.f32 1.5, %v338
    %v340 = vmul.f32 %v335, %v339
    %vm341 = vweird.f32 %v333
    %vm342 = vweird.f32 %v335
    %vm343 = vmor %vm341, %vm342
    %v344 = vsel %vm343, %v335, %v340
    %v345 = vrsqrt.pop %v334
    %v346 = vmul.f32 %v345, %v334
    %v347 = vmul.f32 %v346, %v345
    %v348 = vmul.f32 0.5, %v347
    %v349 = vsub.f32 1.5, %v348
    %v350 = vmul.f32 %v345, %v349
    %vm351 = vweird.f32 %v334
    %vm352 = vweird.f32 %v345
    %vm353 = vmor %vm351, %vm352
    %v354 = vsel %vm353, %v345, %v350
    %v355 = vmul.f32 %v321, %v344
    %v356 = vmul.f32 %v322, %v354
    %v357 = vld [vmem:[%s4] sm:$0x1]
    %v359 = vperm.slane %v357, 0
    %v361 = vmul.f32 %v355, %v359
    %v362 = vmul.f32 %v356, %v359
    %v363 = vld [vmem:[%s5] sm:$0x1]
    %v365 = vperm.slane %v363, 0
    %v367 = vadd.f32 %v361, %v365
    %v368 = vadd.f32 %v362, %v365
    %v369 = vld [vmem:[%s6] sm:$0xff]
    %v370 = vld [vmem:[%s6 + $0x8] sm:$0xff]
    %v371 = vld [vmem:[%s6 + $0x10] sm:$0xff]
    %v372 = vld [vmem:[%s6 + $0x18] sm:$0xff]
    %v373 = vld [vmem:[%s7] sm:$0x1]
    %v375 = vperm.slane %v373, 0
    %v378 = vsel %vm184, %v367, 0
    %v381 = vsel %vm184, %v368, 0
    %383 = vmatpush.msra.mxu0 0.0
    %384 = vmatpush.msra.mxu0 0.0
    %385 = vmatpush.msra.mxu0 0.0
    %386 = vmatpush.msra.mxu0 0.0
    %387 = vmatpush.msra.mxu0 0.0
    %388 = vmatpush.msra.mxu0 0.0
    %389 = vmatpush.msra.mxu0 0.0
    %390 = vmatpush.msra.mxu0 0.0
    %391 = vmatpush.msra.mxu0 0.0
    %392 = vmatpush.msra.mxu0 0.0
    %393 = vmatpush.msra.mxu0 0.0
    %394 = vmatpush.msra.mxu0 0.0
    %395 = vmatpush.msra.mxu0 %v372
    %396 = vmatpush.msra.mxu0 %v371
    %397 = vmatpush.msra.mxu0 %v370
    %398 = vmatpush.msra.mxu0 %v369
    %399 = vmatmul.f32.gmra.mxu0 %v378
    %v400 = vpop.f32.mrf.mxu0
    %v401 = vadd.f32 %v375, %v400
    %402 = vmatmul.f32.gmra.mxu0 %v381
    %v403 = vpop.f32.mrf.mxu0
    %v404 = vadd.f32 %v375, %v403
    %405 = vdwg.mxu0
    %v406 = vmax.f32 %v401, 0.0
    %v407 = vmax.f32 %v404, 0.0
    %v408 = vld [vmem:[#allocation7] sm:$0xff]
    %v409 = vld [vmem:[#allocation7 + $0x8] sm:$0xff]
    %v410 = vld [vmem:[#allocation7 + $0x10] sm:$0xff]
    %v411 = vld [vmem:[#allocation7 + $0x18] sm:$0xff]
    %v412 = vld [vmem:[%s9] sm:$0x1]
    %v414 = vperm.slane %v412, 0
    %v417 = vsel %vm184, %v406, 0
    %v420 = vsel %vm184, %v407, 0
    %422 = vmatpush.msra.mxu0 0.0
    %423 = vmatpush.msra.mxu0 0.0
    %424 = vmatpush.msra.mxu0 0.0
    %425 = vmatpush.msra.mxu0 0.0
    %426 = vmatpush.msra.mxu0 0.0
    %427 = vmatpush.msra.mxu0 0.0
    %428 = vmatpush.msra.mxu0 0.0
    %429 = vmatpush.msra.mxu0 0.0
    %430 = vmatpush.msra.mxu0 0.0
    %431 = vmatpush.msra.mxu0 0.0
    %432 = vmatpush.msra.mxu0 0.0
    %433 = vmatpush.msra.mxu0 0.0
    %434 = vmatpush.msra.mxu0 %v411
    %435 = vmatpush.msra.mxu0 %v410
    %436 = vmatpush.msra.mxu0 %v409
    %437 = vmatpush.msra.mxu0 %v408
    %438 = vmatmul.f32.gmra.mxu0 %v417
    %v439 = vpop.f32.mrf.mxu0
    %v440 = vadd.f32 %v414, %v439
    %441 = vmatmul.f32.gmra.mxu0 %v420
    %v442 = vpop.f32.mrf.mxu0
    %v443 = vadd.f32 %v414, %v442
    %444 = vdwg.mxu0
    %445 = vst.msk [vmem:[%s10] sm:$0xff] %vm184, %v440
    %446 = vst.msk [vmem:[%s10 + $0x8] sm:$0xff] %vm184, %v443
    // Predicated region
    $region58: #{attention_forward.1} parent=1 // pred_check
      _
    $region59: #{attention_forward.1} parent=1 // pred_check_branch
      %448 = sbr.rel (0) target = $region61
    $region60: #{attention_forward.1} parent=1 // pred_region
      _
    $region61: #{attention_forward.1} parent=1 // pred_fallthru
      _
    // Predicated region
    $region62: #{attention_forward.1} parent=1 // pred_check
      _
    $region63: #{attention_forward.1} parent=1 // pred_check_branch
      %450 = sbr.rel (0) target = $region65
    $region64: #{attention_forward.1} parent=1 // pred_region
      _
    $region65: #{attention_forward.1} parent=1 // pred_fallthru
      _
    %451 = vsyncpa [#allocation3], 1
    %452 = vsyncpa [#allocation5], 1
    %453 = vsyncpa [#allocation8], 1

</llo_original>
